<compile_context>
chip_gen: v6e
topology: v6e:2x2x1
jax: 0.10.0
libtpu: 0.0.40
codegen_flags: <defaults>
</compile_context>

<pallas_src>
import functools

import jax
import jax.numpy as jnp
from jax.experimental import pallas as pl
from jax.experimental.pallas import tpu as pltpu


def _round_up(x, m):
    return ((x + m - 1) // m) * m


def _node_prep_kernel(x_ref, w1_ref, w2_ref, vec_ref, o_ref, *, hidden):
    # x_ref:   (TM, F_in)  f32 row tile of flattened nodes
    # w1_ref:  (F_in, H)   bf16
    # w2_ref:  (H, H)      bf16
    # vec_ref: (4, H)      f32 rows = [b1, b2, gamma, beta]
    # o_ref:   (TM, H)     output tile
    x = x_ref[...].astype(jnp.bfloat16)        # cast in-kernel (saves an XLA pass)
    vec = vec_ref[...]
    b1, b2, gamma, beta = vec[0:1], vec[1:2], vec[2:3], vec[3:4]

    # Linear 1 + ReLU: bf16 operands, f32 MXU accumulation.
    h = jnp.dot(x, w1_ref[...], preferred_element_type=jnp.float32) + b1
    h = jnp.maximum(h, 0.0)

    # Linear 2.
    y = jnp.dot(h.astype(jnp.bfloat16), w2_ref[...],
                preferred_element_type=jnp.float32) + b2

    # LayerNorm over the feature axis (two-pass variance, eps = 1e-5).
    inv_h = 1.0 / float(hidden)
    mean = jnp.sum(y, axis=-1, keepdims=True) * inv_h
    d = y - mean
    var = jnp.sum(d * d, axis=-1, keepdims=True) * inv_h
    y_n = d * jax.lax.rsqrt(var + 1e-5)

    o_ref[...] = (y_n * gamma + beta).astype(o_ref.dtype)


def _choose_tile_m(rows, f_in, hidden, out_itemsize, max_tile_m, tile_vmem_budget):
    """Pick the row-tile size: big (amortize step overhead), VMEM-bounded,
    >=2 grid steps when rows permit (v7x megacore), low row-padding waste."""
    rows8 = _round_up(rows, 8)
    # Double-buffered VMEM bytes per row of the streamed tiles (lane-padded).
    per_row = 2 * (_round_up(f_in, 128) * 4 + _round_up(hidden, 128) * out_itemsize)
    vmem_cap = max(8, (tile_vmem_budget // per_row) // 8 * 8)
    tile = min(max_tile_m, vmem_cap, rows8)
    # v7x megacore: ensure at least 2 grid steps when there is enough work.
    if rows8 >= 64:
        tile = min(tile, _round_up((rows8 + 1) // 2, 8))
    # Bound row-padding waste to < ~12.5% of the real rows.
    while tile > 8 and (_round_up(rows, tile) - rows) * 8 > rows:
        tile = _round_up(max(tile // 2, 8), 8)
    return max(8, tile)


def node_prep_forward(params, node_features, *, max_tile_m=4096,
                      out_dtype=jnp.float32):
    """Forward pass of NodePrepModel ('mini' variant).

    node_features: (B, N, F_in) float32
    returns:       (B, N, H)    out_dtype (default f32, matching PyTorch;
                                pass jnp.bfloat16 if downstream tolerates it)
    """
    B, N, F_in = node_features.shape
    H = params["w1"].shape[1]
    rows = B * N
    out_itemsize = jnp.dtype(out_dtype).itemsize

    tile_m = _choose_tile_m(rows, F_in, H, out_itemsize,
                            max_tile_m=max(8, (max_tile_m // 8) * 8),
                            tile_vmem_budget=16 * 1024 * 1024)
    rows_pad = _round_up(rows, tile_m)
    grid = (rows_pad // tile_m,)

    # (B, N, F) -> (B*N, F): feature axis stays last, so this is a view.
    x2d = node_features.reshape(rows, F_in).astype(jnp.float32)
    if rows_pad != rows:
        x2d = jnp.pad(x2d, ((0, rows_pad - rows), (0, 0)))

    # bf16 weights for the MXU; f32 bias/scale/shift stacked into one block.
    w1 = params["w1"].astype(jnp.bfloat16)
    w2 = params["w2"].astype(jnp.bfloat16)
    vec = jnp.concatenate(
        [params["b1"], params["b2"], params["gamma"], params["beta"]],
        axis=0).astype(jnp.float32)                       # (4, H)

    # VMEM budget derived from the actual footprint (lane/sublane padded
    # layouts, double-buffered), with 2x headroom; capped below v7x's 64 MiB.
    vmem_bytes = (
        2 * tile_m * _round_up(F_in, 128) * 4                      # x tiles
        + 2 * tile_m * _round_up(H, 128) * out_itemsize            # out tiles
        + 2 * _round_up(F_in, 16) * _round_up(H, 128) * 2          # W1 (bf16)
        + 2 * _round_up(H, 16) * _round_up(H, 128) * 2             # W2 (bf16)
        + 2 * 8 * _round_up(H, 128) * 4                            # bias stack
    )
    vmem_limit = int(min(max(2 * vmem_bytes, 32 * 1024 * 1024),
                         60 * 1024 * 1024))

    kernel = functools.partial(_node_prep_kernel, hidden=H)

    out2d = pl.pallas_call(
        kernel,
        out_shape=jax.ShapeDtypeStruct((rows_pad, H), out_dtype),
        grid_spec=pltpu.PrefetchScalarGridSpec(
            num_scalar_prefetch=0,
            grid=grid,
            in_specs=[
                pl.BlockSpec((tile_m, F_in), lambda i: (i, 0)),   # x row tile
                pl.BlockSpec((F_in, H),      lambda i: (0, 0)),   # W1 (full)
                pl.BlockSpec((H, H),         lambda i: (0, 0)),   # W2 (full)
                pl.BlockSpec((4, H),         lambda i: (0, 0)),   # [b1,b2,g,b]
            ],
            out_specs=pl.BlockSpec((tile_m, H), lambda i: (i, 0)),
        ),
        compiler_params=pltpu.CompilerParams(
            dimension_semantics=("parallel",),
            vmem_limit_bytes=vmem_limit,
        ),
    )(x2d, w1, w2, vec)

    if rows_pad != rows:
        out2d = out2d[:rows]
    return out2d.reshape(B, N, H)


def _reference_forward(params, x):
    """Pure-JAX reference (same bf16 matmul casts as the kernel)."""
    B, N, F_in = x.shape
    H = params["w1"].shape[1]
    xf = x.reshape(B * N, F_in).astype(jnp.bfloat16)
    h = jnp.dot(xf, params["w1"].astype(jnp.bfloat16),
                preferred_element_type=jnp.float32) + params["b1"]
    h = jnp.maximum(h, 0.0)
    y = jnp.dot(h.astype(jnp.bfloat16), params["w2"].astype(jnp.bfloat16),
                preferred_element_type=jnp.float32) + params["b2"]
    mean = jnp.mean(y, axis=-1, keepdims=True)
    var = jnp.mean((y - mean) ** 2, axis=-1, keepdims=True)
    y = (y - mean) * jax.lax.rsqrt(var + 1e-5)
    y = y * params["gamma"] + params["beta"]
    return y.reshape(B, N, H)


def init_params(key, f_in, hidden):
    """Deterministic synthetic parameters (shapes follow the mini-MLP config)."""
    k1, k2 = jax.random.split(key, 2)
    scale1 = 1.0 / jnp.sqrt(jnp.float32(f_in))
    scale2 = 1.0 / jnp.sqrt(jnp.float32(hidden))
    return {
        "w1": jax.random.normal(k1, (f_in, hidden), jnp.float32) * scale1,
        "b1": jnp.zeros((1, hidden), jnp.float32),
        "w2": jax.random.normal(k2, (hidden, hidden), jnp.float32) * scale2,
        "b2": jnp.zeros((1, hidden), jnp.float32),
        "gamma": jnp.ones((1, hidden), jnp.float32),
        "beta": jnp.zeros((1, hidden), jnp.float32),
    }


if __name__ == "__main__":
    # Small shapes consistent with the node-prep forward:
    # batch of 2 events, 8 nodes each, 16 raw node features -> hidden 32.
    B, N, F_IN, HIDDEN = 2, 8, 16, 32

    key = jax.random.PRNGKey(0)
    k_params, k_data = jax.random.split(key)

    params = init_params(k_params, F_IN, HIDDEN)
    # "batch" dict mirrors the PyTorch forward(batch) signature.
    batch = {"node_features": jax.random.normal(k_data, (B, N, F_IN), jnp.float32)}

    out = node_prep_forward(params, batch["node_features"])
    out = jax.block_until_ready(out)

    assert out.shape == (B, N, HIDDEN), out.shape
    assert bool(jnp.all(jnp.isfinite(out)))

    ref = _reference_forward(params, batch["node_features"])
    max_err = float(jnp.max(jnp.abs(out.astype(jnp.float32) - ref)))
    assert max_err < 2e-2, f"max abs err {max_err}"

    print("KERNEL_OK")
</pallas_src>

<mosaic_0001>
module attributes {stable_mosaic.version = 11 : i64} {
  func.func @_node_prep_kernel(%arg0: i32, %arg1: memref<16x16xf32, #tpu.memory_space<vmem>>, %arg2: memref<16x32xbf16, #tpu.memory_space<vmem>>, %arg3: memref<32x32xbf16, #tpu.memory_space<vmem>>, %arg4: memref<4x32xf32, #tpu.memory_space<vmem>>, %arg5: memref<16x32xf32, #tpu.memory_space<vmem>>) attributes {dimension_semantics = [#tpu.dimension_semantics<parallel>], iteration_bounds = array<i64: 1>, scalar_prefetch = 0 : i64, scratch_operands = 0 : i64, tpu.core_type = #tpu.core_type<tc>, window_params = [{transform_indices = @transform_0, window_bounds = array<i64: 16, 16>}, {pipeline_mode = #tpu.pipeline_mode<synchronous>, transform_indices = @transform_1, window_bounds = array<i64: 16, 32>}, {pipeline_mode = #tpu.pipeline_mode<synchronous>, transform_indices = @transform_2, window_bounds = array<i64: 32, 32>}, {pipeline_mode = #tpu.pipeline_mode<synchronous>, transform_indices = @transform_3, window_bounds = array<i64: 4, 32>}, {transform_indices = @transform_4, window_bounds = array<i64: 16, 32>}]} {
    %c0 = arith.constant 0 : index
    %c0_0 = arith.constant 0 : index
    %0 = vector.load %arg1[%c0, %c0_0] : memref<16x16xf32, #tpu.memory_space<vmem>>, vector<16x16xf32>
    %1 = arith.truncf %0 : vector<16x16xf32> to vector<16x16xbf16>
    %c0_1 = arith.constant 0 : index
    %c0_2 = arith.constant 0 : index
    %2 = vector.load %arg4[%c0_1, %c0_2] : memref<4x32xf32, #tpu.memory_space<vmem>>, vector<4x32xf32>
    %3 = vector.extract_strided_slice %2 {offsets = [0, 0], sizes = [1, 32], strides = [1, 1]} : vector<4x32xf32> to vector<1x32xf32>
    %4 = vector.extract_strided_slice %2 {offsets = [1, 0], sizes = [1, 32], strides = [1, 1]} : vector<4x32xf32> to vector<1x32xf32>
    %5 = vector.extract_strided_slice %2 {offsets = [2, 0], sizes = [1, 32], strides = [1, 1]} : vector<4x32xf32> to vector<1x32xf32>
    %6 = vector.extract_strided_slice %2 {offsets = [3, 0], sizes = [1, 32], strides = [1, 1]} : vector<4x32xf32> to vector<1x32xf32>
    %c0_3 = arith.constant 0 : index
    %c0_4 = arith.constant 0 : index
    %7 = vector.load %arg2[%c0_3, %c0_4] : memref<16x32xbf16, #tpu.memory_space<vmem>>, vector<16x32xbf16>
    %cst = arith.constant dense<0.000000e+00> : vector<16x32xf32>
    %8 = tpu.matmul %1, %7, %cst {dimension_numbers = #tpu.dot_dimension_numbers<[1], [0], [0], [1], [0, 0, 1, 1], [], []>} : vector<16x16xbf16>, vector<16x32xbf16>, vector<16x32xf32> -> vector<16x32xf32>
    %9 = vector.broadcast %3 : vector<1x32xf32> to vector<16x32xf32>
    %10 = arith.addf %8, %9 : vector<16x32xf32>
    %cst_5 = arith.constant 0.000000e+00 : f32
    %11 = vector.broadcast %cst_5 : f32 to vector<16x32xf32>
    %12 = arith.maximumf %10, %11 : vector<16x32xf32>
    %13 = arith.truncf %12 : vector<16x32xf32> to vector<16x32xbf16>
    %c0_6 = arith.constant 0 : index
    %c0_7 = arith.constant 0 : index
    %14 = vector.load %arg3[%c0_6, %c0_7] : memref<32x32xbf16, #tpu.memory_space<vmem>>, vector<32x32xbf16>
    %cst_8 = arith.constant dense<0.000000e+00> : vector<16x32xf32>
    %15 = tpu.matmul %13, %14, %cst_8 {dimension_numbers = #tpu.dot_dimension_numbers<[1], [0], [0], [1], [0, 0, 1, 1], [], []>} : vector<16x32xbf16>, vector<32x32xbf16>, vector<16x32xf32> -> vector<16x32xf32>
    %16 = vector.broadcast %4 : vector<1x32xf32> to vector<16x32xf32>
    %17 = arith.addf %15, %16 : vector<16x32xf32>
    %cst_9 = arith.constant dense<0.000000e+00> : vector<16xf32>
    %18 = vector.multi_reduction <add>, %17, %cst_9 [1] : vector<16x32xf32> to vector<16xf32>
    %19 = vector.shape_cast %18 : vector<16xf32> to vector<16x1xf32>
    %cst_10 = arith.constant 3.125000e-02 : f32
    %20 = vector.broadcast %cst_10 : f32 to vector<16x1xf32>
    %21 = arith.mulf %19, %20 : vector<16x1xf32>
    %22 = vector.broadcast %21 : vector<16x1xf32> to vector<16x32xf32>
    %23 = arith.subf %17, %22 : vector<16x32xf32>
    %24 = arith.mulf %23, %23 : vector<16x32xf32>
    %cst_11 = arith.constant dense<0.000000e+00> : vector<16xf32>
    %25 = vector.multi_reduction <add>, %24, %cst_11 [1] : vector<16x32xf32> to vector<16xf32>
    %26 = vector.shape_cast %25 : vector<16xf32> to vector<16x1xf32>
    %cst_12 = arith.constant 3.125000e-02 : f32
    %27 = vector.broadcast %cst_12 : f32 to vector<16x1xf32>
    %28 = arith.mulf %26, %27 : vector<16x1xf32>
    %cst_13 = arith.constant 9.99999974E-6 : f32
    %29 = vector.broadcast %cst_13 : f32 to vector<16x1xf32>
    %30 = arith.addf %28, %29 : vector<16x1xf32>
    %31 = math.rsqrt %30 : vector<16x1xf32>
    %32 = vector.broadcast %31 : vector<16x1xf32> to vector<16x32xf32>
    %33 = arith.mulf %23, %32 : vector<16x32xf32>
    %34 = vector.broadcast %5 : vector<1x32xf32> to vector<16x32xf32>
    %35 = arith.mulf %33, %34 : vector<16x32xf32>
    %36 = vector.broadcast %6 : vector<1x32xf32> to vector<16x32xf32>
    %37 = arith.addf %35, %36 : vector<16x32xf32>
    %c0_14 = arith.constant 0 : index
    %c0_15 = arith.constant 0 : index
    %38 = vector.load %arg5[%c0_14, %c0_15] : memref<16x32xf32, #tpu.memory_space<vmem>>, vector<16x32xf32>
    tpu.vector_store %arg5[%c0_14, %c0_15], %37 {strides = array<i32>} : memref<16x32xf32, #tpu.memory_space<vmem>>, vector<16x32xf32>,
    return
  }
  func.func @transform_0(%arg0: i32) -> (i32, i32) {
    %c0_i32 = arith.constant 0 : i32
    %c0_i32_0 = arith.constant 0 : i32
    return %arg0, %c0_i32 : i32, i32
  }
  func.func @transform_1(%arg0: i32) -> (i32, i32) {
    %c0_i32 = arith.constant 0 : i32
    %c0_i32_0 = arith.constant 0 : i32
    %c0_i32_1 = arith.constant 0 : i32
    return %c0_i32, %c0_i32_0 : i32, i32
  }
  func.func @transform_2(%arg0: i32) -> (i32, i32) {
    %c0_i32 = arith.constant 0 : i32
    %c0_i32_0 = arith.constant 0 : i32
    %c0_i32_1 = arith.constant 0 : i32
    return %c0_i32, %c0_i32_0 : i32, i32
  }
  func.func @transform_3(%arg0: i32) -> (i32, i32) {
    %c0_i32 = arith.constant 0 : i32
    %c0_i32_0 = arith.constant 0 : i32
    %c0_i32_1 = arith.constant 0 : i32
    return %c0_i32, %c0_i32_0 : i32, i32
  }
  func.func @transform_4(%arg0: i32) -> (i32, i32) {
    %c0_i32 = arith.constant 0 : i32
    %c0_i32_0 = arith.constant 0 : i32
    return %arg0, %c0_i32 : i32, i32
  }
}

</mosaic_0001>

<llo_original>
// kernel: tpu_custom_call.1
$region0: #{tpu_custom_call.1}
  #allocation0 [shape = 'u32[]', space=smem, size = 0x4, offset = 0x4, fixed_abs, tag = 'smem constant byte address 0x4 - core index']
  #allocation1 [shape = 'u32[144,128]{1,0:T(1,128)}', space=vmem, size = 0x12000, scoped, tag = 'internal scratch']
  %s0 = inlined_call_operand.hbm [shape: f32[16,16], index: 0, kind: input, shape index: {}]
  %s1 = inlined_call_operand.hbm [shape: bf16[16,32], index: 1, kind: input, shape index: {}]
  %s2 = inlined_call_operand.hbm [shape: bf16[32,32], index: 2, kind: input, shape index: {}]
  %s3 = inlined_call_operand.vmem [shape: f32[4,32], index: 3, kind: input, shape index: {}]
  %s4 = inlined_call_operand.hbm [shape: f32[16,32], index: 4, kind: output, shape index: {}]
  %s5 = sld [smem:[#allocation0]]
  $region38: #{tpu_custom_call.1} parent=0
    _
  %s7 = ssub.s32 1, %s5
  %s8 = scalar_select 0, %s7, %s5
  $region1: #{tpu_custom_call.1} parent=0
    #allocation2 [shape = 'u8[8192]{0}', space=vmem, size = 0x2000, scoped, tag = 'input window, operand 0, single buffered']
    #allocation3 [shape = 's32[1]{0}', space=sflag, size = 0x4, scoped, tag = 'scoped memory for tpu_custom_call.1']
    #allocation4 [shape = 's32[1]{0}', space=sflag, size = 0x4, scoped, tag = 'scoped memory for tpu_custom_call.1']
    #allocation5 [shape = 'u8[4096]{0}', space=vmem, size = 0x1000, scoped, tag = 'input window, operand 1, single buffered']
    #allocation6 [shape = 's32[1]{0}', space=sflag, size = 0x4, scoped, tag = 'scoped memory for tpu_custom_call.1']
    #allocation7 [shape = 'u8[8192]{0}', space=vmem, size = 0x2000, scoped, tag = 'input window, operand 2, single buffered']
    #allocation8 [shape = 'u8[8192]{0}', space=vmem, size = 0x2000, scoped, tag = 'output window, operand 0, single buffered']
    %9 = vsyncpa [#allocation3], 0
    %10 = vsyncpa [#allocation6], 0
    %11 = vsyncpa [#allocation4], 0
    // Predicated region
    $region2: #{tpu_custom_call.1} parent=1 // pred_check
      _
    $region3: #{tpu_custom_call.1} parent=1 // pred_check_branch
      %13 = sbr.rel (0) target = $region5
    $region4: #{tpu_custom_call.1} parent=1 // pred_region
      %s15 = ssub.s32 256, 256
      %16 = vsyncadd [#allocation3], %s15
      %s17 = sshll.u32 [#allocation2], 4
      %s18 = int_to_ptr.vmem [resolvable:$true] %s17
      %23 = dma.hbm_to_vmem [thread:$0]  %s0, 256, %s18, [#allocation3], 128, 128, 8
    $region5: #{tpu_custom_call.1} parent=1 // pred_fallthru
      _
    // Predicated region
    $region6: #{tpu_custom_call.1} parent=1 // pred_check
      _
    $region7: #{tpu_custom_call.1} parent=1 // pred_check_branch
      %25 = sbr.rel (0) target = $region9
    $region8: #{tpu_custom_call.1} parent=1 // pred_region
      %s27 = ssub.s32 128, 128
      %28 = vsyncadd [#allocation6], %s27
      %s29 = sshll.u32 [#allocation5], 4
      %s30 = int_to_ptr.vmem [resolvable:$true] %s29
      %35 = dma.hbm_to_vmem [thread:$0]  %s1, 128, %s30, [#allocation6], 64, 64, 4
    $region9: #{tpu_custom_call.1} parent=1 // pred_fallthru
      _
    // Predicated region
    $region10: #{tpu_custom_call.1} parent=1 // pred_check
      _
    $region11: #{tpu_custom_call.1} parent=1 // pred_check_branch
      %37 = sbr.rel (0) target = $region13
    $region12: #{tpu_custom_call.1} parent=1 // pred_region
      %s39 = ssub.s32 256, 256
      %40 = vsyncadd [#allocation6], %s39
      %s41 = sshll.u32 [#allocation7], 4
      %s42 = int_to_ptr.vmem [resolvable:$true] %s41
      %47 = dma.hbm_to_vmem [thread:$0]  %s2, 256, %s42, [#allocation6], 64, 64, 4
    $region13: #{tpu_custom_call.1} parent=1 // pred_fallthru
      _
    // Predicated region
    $region14: #{tpu_custom_call.1} parent=1 // pred_check
      _
    $region15: #{tpu_custom_call.1} parent=1 // pred_check_branch
      %49 = sbr.rel (0) target = $region17
    $region16: #{tpu_custom_call.1} parent=1 // pred_region
      _
    $region17: #{tpu_custom_call.1} parent=1 // pred_fallthru
      _
    // Predicated region
    $region18: #{tpu_custom_call.1} parent=1 // pred_check
      _
    $region19: #{tpu_custom_call.1} parent=1 // pred_check_branch
      %51 = sbr.rel (0) target = $region21
    $region20: #{tpu_custom_call.1} parent=1 // pred_region
      %52 = dma.done [#allocation3], 256
    $region21: #{tpu_custom_call.1} parent=1 // pred_fallthru
      _
    // Predicated region
    $region22: #{tpu_custom_call.1} parent=1 // pred_check
      _
    $region23: #{tpu_custom_call.1} parent=1 // pred_check_branch
      %54 = sbr.rel (0) target = $region25
    $region24: #{tpu_custom_call.1} parent=1 // pred_region
      %55 = dma.done [#allocation6], 128
    $region25: #{tpu_custom_call.1} parent=1 // pred_fallthru
      _
    // Predicated region
    $region26: #{tpu_custom_call.1} parent=1 // pred_check
      _
    $region27: #{tpu_custom_call.1} parent=1 // pred_check_branch
      %57 = sbr.rel (0) target = $region29
    $region28: #{tpu_custom_call.1} parent=1 // pred_region
      %58 = dma.done [#allocation6], 256
    $region29: #{tpu_custom_call.1} parent=1 // pred_fallthru
      _
    %v60 = vld [vmem:[#allocation2] sm:$0xff]
    %v61 = vld [vmem:[#allocation2 + $0x8] sm:$0xff]
    %v62 = vpack.c.bf16 %v61, %v60
    %v63 = vld [vmem:[%s3] sm:$0xf]
    %v64 = vld [vmem:[#allocation5] sm:$0xf]
    %v65 = vld [vmem:[#allocation5 + $0x4] sm:$0xf]
    %v66 = vlaneseq
    %v67 = vshrl.u32 %v66, 7
    %v68 = vsub.s32 0, %v67
    %v69 = vrot.slane %v63, %v68
    %v72 = vunpack.c.l.b16 %v64
    %v73 = vunpack.c.l.b16 %v65
    %v74 = vpack.c.b16 %v73, %v72
    %vm76 = vcmask 130048
    %v78 = vsel %vm76, %v62, 0
    %80 = vmatprep.subr.bf16.mxu0 0
    %81 = vmatpush1.bf16.msra.mxu0 0
    %82 = vmatprep.subr.bf16.mxu0 0
    %83 = vmatpush1.bf16.msra.mxu0 0
    %84 = vmatprep.subr.bf16.mxu0 0
    %85 = vmatpush1.bf16.msra.mxu0 0
    %86 = vmatprep.subr.bf16.mxu0 0
    %87 = vmatpush1.bf16.msra.mxu0 0
    %88 = vmatprep.subr.bf16.mxu0 0
    %89 = vmatpush1.bf16.msra.mxu0 0
    %90 = vmatprep.subr.bf16.mxu0 0
    %91 = vmatpush1.bf16.msra.mxu0 0
    %92 = vmatprep.subr.bf16.mxu0 0
    %93 = vmatpush1.bf16.msra.mxu0 0
    %94 = vmatprep.subr.bf16.mxu0 0
    %95 = vmatpush1.bf16.msra.mxu0 %v74
    %96 = vmatprep.subr.bf16.mxu0 0
    %97 = vmatpush2.bf16.msra.mxu0 0
    %98 = vmatprep.subr.bf16.mxu0 0
    %99 = vmatpush2.bf16.msra.mxu0 0
    %100 = vmatprep.subr.bf16.mxu0 0
    %101 = vmatpush2.bf16.msra.mxu0 0
    %102 = vmatprep.subr.bf16.mxu0 0
    %103 = vmatpush2.bf16.msra.mxu0 0
    %104 = vmatprep.subr.bf16.mxu0 0
    %105 = vmatpush2.bf16.msra.mxu0 0
    %106 = vmatprep.subr.bf16.mxu0 0
    %107 = vmatpush2.bf16.msra.mxu0 0
    %108 = vmatprep.subr.bf16.mxu0 0
    %109 = vmatpush2.bf16.msra.mxu0 0
    %110 = vmatprep.subr.bf16.mxu0 0
    %111 = vmatpush2.bf16.msra.mxu0 0
    %112 = vmatprep.mubr.bf16.mxu0 0
    %113 = vmatmul.mubr.bf16.gmra.mxu0 %v78
    %v114 = vpop.f32.mrf.mxu0
    %v115 = vadd.f32 %v69, %v114
    %v116 = vpop.f32.mrf.mxu0
    %v117 = vpop.f32.mrf.mxu0
    %v118 = vadd.f32 %v69, %v117
    %v119 = vpop.f32.mrf.mxu0
    %120 = vdwg.mxu0
    %v121 = vmax.f32 %v115, 0.0
    %v122 = vmax.f32 %v118, 0.0
    %v123 = vpack.c.bf16 %v122, %v121
    %v124 = vld [vmem:[#allocation7] sm:$0xf]
    %v125 = vld [vmem:[#allocation7 + $0x4] sm:$0xf]
    %v126 = vld [vmem:[#allocation7 + $0x8] sm:$0xf]
    %v127 = vld [vmem:[#allocation7 + $0xc] sm:$0xf]
    %v128 = vlaneseq
    %v129 = vshrl.u32 %v128, 7
    %v130 = vsub.s32 1, %v129
    %v131 = vrot.slane %v63, %v130
    %v136 = vunpack.c.l.b16 %v124
    %v137 = vunpack.c.l.b16 %v125
    %v138 = vunpack.c.l.b16 %v126
    %v139 = vunpack.c.l.b16 %v127
    %v140 = vpack.c.b16 %v137, %v136
    %v141 = vpack.c.b16 %v139, %v138
    %vm144 = vcmask 261120
    %v146 = vsel %vm144, %v123, 0
    %148 = vmatprep.subr.bf16.mxu0 0
    %149 = vmatpush1.bf16.msra.mxu0 0
    %150 = vmatprep.subr.bf16.mxu0 0
    %151 = vmatpush1.bf16.msra.mxu0 0
    %152 = vmatprep.subr.bf16.mxu0 0
    %153 = vmatpush1.bf16.msra.mxu0 0
    %154 = vmatprep.subr.bf16.mxu0 0
    %155 = vmatpush1.bf16.msra.mxu0 0
    %156 = vmatprep.subr.bf16.mxu0 0
    %157 = vmatpush1.bf16.msra.mxu0 0
    %158 = vmatprep.subr.bf16.mxu0 0
    %159 = vmatpush1.bf16.msra.mxu0 0
    %160 = vmatprep.subr.bf16.mxu0 0
    %161 = vmatpush1.bf16.msra.mxu0 %v141
    %162 = vmatprep.subr.bf16.mxu0 0
    %163 = vmatpush1.bf16.msra.mxu0 %v140
    %164 = vmatprep.subr.bf16.mxu0 0
    %165 = vmatpush2.bf16.msra.mxu0 0
    %166 = vmatprep.subr.bf16.mxu0 0
    %167 = vmatpush2.bf16.msra.mxu0 0
    %168 = vmatprep.subr.bf16.mxu0 0
    %169 = vmatpush2.bf16.msra.mxu0 0
    %170 = vmatprep.subr.bf16.mxu0 0
    %171 = vmatpush2.bf16.msra.mxu0 0
    %172 = vmatprep.subr.bf16.mxu0 0
    %173 = vmatpush2.bf16.msra.mxu0 0
    %174 = vmatprep.subr.bf16.mxu0 0
    %175 = vmatpush2.bf16.msra.mxu0 0
    %176 = vmatprep.subr.bf16.mxu0 0
    %177 = vmatpush2.bf16.msra.mxu0 0
    %178 = vmatprep.subr.bf16.mxu0 0
    %179 = vmatpush2.bf16.msra.mxu0 0
    %180 = vmatprep.mubr.bf16.mxu0 0
    %181 = vmatmul.mubr.bf16.gmra.mxu0 %v146
    %v182 = vpop.f32.mrf.mxu0
    %v183 = vadd.f32 %v131, %v182
    %v184 = vpop.f32.mrf.mxu0
    %v185 = vpop.f32.mrf.mxu0
    %v186 = vadd.f32 %v131, %v185
    %v187 = vpop.f32.mrf.mxu0
    %188 = vdwg.mxu0
    %v189 = vsel %vm144, %v183, 0.0
    %190 = vadd.xlane.f32.xlu0 %v189
    %v191 = vpop.xlane.xlu0 %190
    %v192 = vsel %vm144, %v186, 0.0
    %193 = vadd.xlane.f32.xlu0 %v192
    %v194 = vpop.xlane.xlu0 %193
    %v195 = vmul.f32 %v191, 0.03125
    %v196 = vmul.f32 %v194, 0.03125
    %v197 = vsub.f32 %v183, %v195
    %v198 = vsub.f32 %v186, %v196
    %v199 = vmul.f32 %v197, %v197
    %v200 = vmul.f32 %v198, %v198
    %v201 = vsel %vm144, %v199, 0.0
    %202 = vadd.xlane.f32.xlu0 %v201
    %v203 = vpop.xlane.xlu0 %202
    %v204 = vsel %vm144, %v200, 0.0
    %205 = vadd.xlane.f32.xlu0 %v204
    %v206 = vpop.xlane.xlu0 %205
    %v207 = vmul.f32 %v203, 0.03125
    %v208 = vmul.f32 %v206, 0.03125
    %v209 = vadd.f32 %v207, 1e-05
    %v210 = vadd.f32 %v208, 1e-05
    %v211 = vrsqrt.pop %v209
    %v212 = vrsqrt.pop %v210
    %v213 = vmul.f32 %v197, %v211
    %v214 = vmul.f32 %v198, %v212
    %v215 = vlaneseq
    %v216 = vshrl.u32 %v215, 7
    %v217 = vsub.s32 2, %v216
    %v218 = vrot.slane %v63, %v217
    %v219 = vmul.f32 %v213, %v218
    %v220 = vmul.f32 %v214, %v218
    %v221 = vlaneseq
    %v222 = vshrl.u32 %v221, 7
    %v223 = vsub.s32 3, %v222
    %v224 = vrot.slane %v63, %v223
    %v225 = vadd.f32 %v219, %v224
    %v226 = vadd.f32 %v220, %v224
    %227 = vst.msk [vmem:[#allocation8] sm:$0xff] %vm144, %v225
    %228 = vst.msk [vmem:[#allocation8 + $0x8] sm:$0xff] %vm144, %v226
    // Predicated region
    $region30: #{tpu_custom_call.1} parent=1 // pred_check
      _
    $region31: #{tpu_custom_call.1} parent=1 // pred_check_branch
      %230 = sbr.rel (0) target = $region33
    $region32: #{tpu_custom_call.1} parent=1 // pred_region
      %s232 = ssub.s32 256, 256
      %233 = vsyncadd [#allocation4], %s232
      %s234 = sshll.u32 [#allocation8], 4
      %s235 = int_to_ptr.vmem [resolvable:$true] %s234
      %240 = dma.vmem_to_hbm [thread:$0]  %s235, 256, %s4, [#allocation4], 128, 128, 8
    $region33: #{tpu_custom_call.1} parent=1 // pred_fallthru
      _
    // Predicated region
    $region34: #{tpu_custom_call.1} parent=1 // pred_check
      _
    $region35: #{tpu_custom_call.1} parent=1 // pred_check_branch
      %242 = sbr.rel (0) target = $region37
    $region36: #{tpu_custom_call.1} parent=1 // pred_region
      %243 = dma.done [#allocation4], 256
    $region37: #{tpu_custom_call.1} parent=1 // pred_fallthru
      _
    %244 = vsyncpa [#allocation3], 1
    %245 = vsyncpa [#allocation6], 1
    %246 = vsyncpa [#allocation4], 1

</llo_original>
